<compile_context>
chip_gen: v6e
topology: v6e:2x2x1
jax: 0.10.0
libtpu: 0.0.40
codegen_flags: <defaults>
</compile_context>

<pallas_src>
import functools
import math

import jax
import jax.numpy as jnp
import numpy as np
from jax import lax
from jax.experimental import pallas as pl
from jax.experimental.pallas import tpu as pltpu

_INV_SQRT2 = 0.7071067811865476


def _round_up(x, m):
    return (x + m - 1) // m * m


def _cdiv(a, b):
    return -(-a // b)


def _down128(v):
    return max(128, (v // 128) * 128)


@functools.lru_cache(maxsize=1)
def _vmem_capacity_bytes() -> int:
    """Physical VMEM per core (generation-aware), with conservative fallbacks."""
    try:
        return int(pltpu.get_tpu_info().vmem_capacity_bytes)
    except Exception:
        pass
    try:
        kind = jax.devices()[0].device_kind.lower()
        if "7" in kind:           # v7x: 64 MiB per TensorCore
            return 64 << 20
        return 128 << 20          # v5e / v6e: 128 MiB
    except Exception:
        return 64 << 20           # safe everywhere


def _ffn_kernel(x_ref, w1_ref, b1_ref, w2_ref, b2_ref, o_ref, acc_ref):
    """One (row-tile, hidden-tile) grid step.

    (tm, Dp) @ (Dp, th) -> +b1 -> GELU -> (tm, th) @ (th, Dp) accumulated into
    a (tm, Dp) f32 scratch; bias b2 added and output stored on the last H step.
    Operands go to the MXU in their native dtype; accumulation is f32.
    """
    kh = pl.program_id(1)

    @pl.when(kh == 0)
    def _init():
        acc_ref[...] = jnp.zeros_like(acc_ref)

    h = jnp.dot(x_ref[...], w1_ref[...], preferred_element_type=jnp.float32)
    h = h + b1_ref[...].astype(jnp.float32)
    # Exact (erf) GELU — matches torch.nn.GELU() default; fused form saves a mul.
    h = h * (0.5 + 0.5 * lax.erf(h * jnp.float32(_INV_SQRT2)))
    # Dropout(p=0.0) / eval mode == identity.
    acc_ref[...] += jnp.dot(
        h.astype(w2_ref.dtype), w2_ref[...], preferred_element_type=jnp.float32
    )

    @pl.when(kh == pl.num_programs(1) - 1)
    def _finalize():
        out = acc_ref[...] + b2_ref[...].astype(jnp.float32)
        o_ref[...] = out.astype(o_ref.dtype)


@functools.partial(
    jax.jit, static_argnames=("row_tile", "h_tile", "vmem_cap", "out_dtype")
)
def _feed_forward_pallas(x2d, w1, b1, w2, b2, *, row_tile, h_tile, vmem_cap, out_dtype):
    M, D = x2d.shape
    H = w1.shape[1]
    elt = x2d.dtype.itemsize
    welt = w1.dtype.itemsize

    # Lane-dense feature dims (multiples of 128).
    Dp = _round_up(D, 128)

    # ---- Row tile: keep >=2 grid steps on the parallel M axis (megacore). ----
    tm = _round_up(min(row_tile, max(M, 8)), 8)
    if M > 8:
        tm = min(tm, _round_up(_cdiv(M, 2), 8))
    Mp = _round_up(M, tm)

    # ---- Hidden tile: stream W1/W2 over the "arbitrary" H axis. ----
    th = _down128(min(_round_up(H, 128), _round_up(h_tile, 128)))
    budget = (vmem_cap * 85) // 100     # leave headroom for Mosaic scratch/semaphores

    def vmem_est(tm_, th_):
        return (
            2 * tm_ * Dp * elt                      # x tile (double buffered)
            + 2 * tm_ * Dp * elt                    # out tile
            + 2 * (Dp * th_ + th_ * Dp) * welt      # W1 + W2 blocks (double buffered)
            + 2 * (th_ + Dp) * welt                 # biases
            + tm_ * Dp * 4                          # f32 accumulator scratch
            + tm_ * th_ * (4 + welt)                # f32 hidden tile + cast copy
        )

    while vmem_est(tm, th) > budget and th > 128:
        th = _down128(th // 2)
    while vmem_est(tm, th) > budget and tm > 64:
        tm = max(8, _round_up(tm // 2, 8))
        Mp = _round_up(M, tm)
    Hp = _round_up(H, th)

    vmem_limit = int(min(max(vmem_est(tm, th) + (8 << 20), 32 << 20), budget))

    # Pad only when needed (lane-aligned shapes emit no pad ops).
    xp = x2d if (Mp == M and Dp == D) else jnp.pad(x2d, ((0, Mp - M), (0, Dp - D)))
    w1p = w1 if (Dp == D and Hp == H) else jnp.pad(w1, ((0, Dp - D), (0, Hp - H)))
    w2p = w2 if (Dp == D and Hp == H) else jnp.pad(w2, ((0, Hp - H), (0, Dp - D)))
    b1p = (b1 if Hp == H else jnp.pad(b1, (0, Hp - H))).reshape(1, Hp)
    b2p = (b2 if Dp == D else jnp.pad(b2, (0, Dp - D))).reshape(1, Dp)

    grid = (Mp // tm, Hp // th)

    in_specs = [
        pl.BlockSpec((tm, Dp), lambda i, k: (i, 0)),   # x row tile (const over H axis)
        pl.BlockSpec((Dp, th), lambda i, k: (0, k)),   # W1 hidden slab
        pl.BlockSpec((1, th), lambda i, k: (0, k)),    # b1 slab
        pl.BlockSpec((th, Dp), lambda i, k: (k, 0)),   # W2 hidden slab
        pl.BlockSpec((1, Dp), lambda i, k: (0, 0)),    # b2 (const)
    ]
    out_spec = pl.BlockSpec((tm, Dp), lambda i, k: (i, 0))

    # Advisory cost for the XLA scheduler around the custom call.
    cost = pl.CostEstimate(
        flops=4 * Mp * Dp * Hp,
        transcendentals=Mp * Hp,
        bytes_accessed=int(
            Mp * Dp * elt                                # x
            + (Dp * Hp + Hp * Dp + Hp + Dp) * welt       # weights + biases
            + Mp * Dp * jnp.dtype(out_dtype).itemsize    # out
        ),
    )

    out2d = pl.pallas_call(
        _ffn_kernel,
        out_shape=jax.ShapeDtypeStruct((Mp, Dp), out_dtype),
        grid_spec=pltpu.PrefetchScalarGridSpec(
            num_scalar_prefetch=0,
            grid=grid,
            in_specs=in_specs,
            out_specs=out_spec,
            scratch_shapes=[pltpu.VMEM((tm, Dp), jnp.float32)],
        ),
        compiler_params=pltpu.CompilerParams(
            dimension_semantics=("parallel", "arbitrary"),
            vmem_limit_bytes=vmem_limit,
        ),
        cost_estimate=cost,
    )(xp, w1p, b1p, w2p, b2p)

    if Mp == M and Dp == D:
        return out2d
    return out2d[:M, :D]


def _gelu_exact(x):
    return 0.5 * x * (1.0 + lax.erf(x * _INV_SQRT2))


@jax.jit
def _feed_forward_xla(x, w1, b1, w2, b2):
    # Fused XLA path for tiny feature dims where lane padding wastes MXU work.
    h = _gelu_exact(jnp.dot(x, w1) + b1)
    return jnp.dot(h, w2) + b2


def feed_forward(
    x, w1, b1, w2, b2, *, row_tile=512, h_tile=512, matmul_dtype=None, min_pallas_dim=128
):
    """FeedForward: Linear(D,H) -> GELU -> Dropout(0) -> Linear(H,D) -> Dropout(0).

    x: [..., D]; w1: [D, H]; b1: [H]; w2: [H, D]; b2: [D].
    matmul_dtype: optional (e.g. jnp.bfloat16) cast of x/W1/W2 for the MXU;
    accumulation stays f32 and the output is returned in x.dtype.
    """
    *lead, D = x.shape
    H = w1.shape[1]

    # Tiny feature dims: padding 32/64 -> 128 lanes wastes 4-8x MXU work; XLA wins.
    if D < min_pallas_dim or H < min_pallas_dim:
        return _feed_forward_xla(x, w1, b1, w2, b2)

    M = math.prod(lead) if lead else 1
    x2d = x.reshape(M, D)
    out_dtype = np.dtype(x.dtype)

    if matmul_dtype is not None:
        x2d = x2d.astype(matmul_dtype)
        w1 = w1.astype(matmul_dtype)
        w2 = w2.astype(matmul_dtype)

    out2d = _feed_forward_pallas(
        x2d, w1, b1, w2, b2,
        row_tile=int(row_tile),
        h_tile=int(h_tile),
        vmem_cap=_vmem_capacity_bytes(),
        out_dtype=out_dtype,
    )
    return out2d.reshape(*lead, D)


def _reference(x, w1, b1, w2, b2):
    h = x @ w1 + b1
    h = 0.5 * h * (1.0 + lax.erf(h / jnp.sqrt(2.0)))
    return h @ w2 + b2


if __name__ == "__main__":
    # Small, lane-aligned shapes consistent with FeedForward(dim=128, hidden_dim=256)
    # applied to tokens of shape [batch=2, seq=16, dim=128] — exercises the Pallas path.
    B, N, D, H = 2, 16, 128, 256

    key = jax.random.PRNGKey(0)
    kx, k1, k2, k3, k4 = jax.random.split(key, 5)

    x = jax.random.normal(kx, (B, N, D), dtype=jnp.float32)

    # PyTorch-Linear-style uniform init: U(-1/sqrt(fan_in), 1/sqrt(fan_in)).
    lim1 = 1.0 / float(D) ** 0.5
    lim2 = 1.0 / float(H) ** 0.5
    w1 = jax.random.uniform(k1, (D, H), jnp.float32, -lim1, lim1)
    b1 = jax.random.uniform(k2, (H,), jnp.float32, -lim1, lim1)
    w2 = jax.random.uniform(k3, (H, D), jnp.float32, -lim2, lim2)
    b2 = jax.random.uniform(k4, (D,), jnp.float32, -lim2, lim2)

    out = feed_forward(x, w1, b1, w2, b2)
    out = jax.block_until_ready(out)

    ref = _reference(x, w1, b1, w2, b2)
    assert out.shape == (B, N, D)
    assert jnp.allclose(out, ref, atol=1e-5, rtol=1e-5), "mismatch vs reference (pallas)"

    # Tiny-dim configuration (dim=32, hidden_dim=64) takes the fused XLA path.
    xs = jax.random.normal(kx, (2, 8, 32), dtype=jnp.float32)
    w1s, b1s, w2s, b2s = w1[:32, :64], b1[:64], w2[:64, :32], b2[:32]
    outs = jax.block_until_ready(feed_forward(xs, w1s, b1s, w2s, b2s))
    assert jnp.allclose(outs, _reference(xs, w1s, b1s, w2s, b2s), atol=1e-5, rtol=1e-5), \
        "mismatch vs reference (tiny-dim fallback)"

    print("KERNEL_OK")
</pallas_src>

<mosaic_0001>
module attributes {stable_mosaic.version = 11 : i64} {
  func.func @_ffn_kernel(%arg0: i32, %arg1: i32, %arg2: memref<16x128xf32, #tpu.memory_space<vmem>>, %arg3: memref<128x256xf32, #tpu.memory_space<vmem>>, %arg4: memref<1x256xf32, #tpu.memory_space<vmem>>, %arg5: memref<256x128xf32, #tpu.memory_space<vmem>>, %arg6: memref<1x128xf32, #tpu.memory_space<vmem>>, %arg7: memref<16x128xf32, #tpu.memory_space<vmem>>, %arg8: memref<16x128xf32, #tpu.memory_space<vmem>>) attributes {dimension_semantics = [#tpu.dimension_semantics<parallel>, #tpu.dimension_semantics<arbitrary>], iteration_bounds = array<i64: 2, 1>, scalar_prefetch = 0 : i64, scratch_operands = 1 : i64, tpu.core_type = #tpu.core_type<tc>, window_params = [{transform_indices = @transform_0, window_bounds = array<i64: 16, 128>}, {transform_indices = @transform_1, window_bounds = array<i64: 128, 256>}, {transform_indices = @transform_2, window_bounds = array<i64: 1, 256>}, {transform_indices = @transform_3, window_bounds = array<i64: 256, 128>}, {pipeline_mode = #tpu.pipeline_mode<synchronous>, transform_indices = @transform_4, window_bounds = array<i64: 1, 128>}, {transform_indices = @transform_5, window_bounds = array<i64: 16, 128>}]} {
    %c0_i32 = arith.constant 0 : i32
    %0 = arith.cmpi eq, %arg1, %c0_i32 : i32
    %1 = arith.extui %0 : i1 to i32
    %c0_i32_0 = arith.constant 0 : i32
    %2 = arith.cmpi ne, %1, %c0_i32_0 : i32
    scf.if %2 {
      %cst_18 = arith.constant 0.000000e+00 : f32
      %25 = vector.broadcast %cst_18 : f32 to vector<16x128xf32>
      %c0_19 = arith.constant 0 : index
      %c0_20 = arith.constant 0 : index
      %26 = vector.load %arg8[%c0_19, %c0_20] : memref<16x128xf32, #tpu.memory_space<vmem>>, vector<16x128xf32>
      tpu.vector_store %arg8[%c0_19, %c0_20], %25 {strides = array<i32>} : memref<16x128xf32, #tpu.memory_space<vmem>>, vector<16x128xf32>,
    } else {
    }
    %c0 = arith.constant 0 : index
    %c0_1 = arith.constant 0 : index
    %3 = vector.load %arg2[%c0, %c0_1] : memref<16x128xf32, #tpu.memory_space<vmem>>, vector<16x128xf32>
    %c0_2 = arith.constant 0 : index
    %c0_3 = arith.constant 0 : index
    %4 = vector.load %arg3[%c0_2, %c0_3] : memref<128x256xf32, #tpu.memory_space<vmem>>, vector<128x256xf32>
    %cst = arith.constant dense<0.000000e+00> : vector<16x256xf32>
    %5 = tpu.matmul %3, %4, %cst {dimension_numbers = #tpu.dot_dimension_numbers<[1], [0], [0], [1], [0, 0, 1, 1], [], []>} : vector<16x128xf32>, vector<128x256xf32>, vector<16x256xf32> -> vector<16x256xf32>
    %c0_4 = arith.constant 0 : index
    %c0_5 = arith.constant 0 : index
    %6 = vector.load %arg4[%c0_4, %c0_5] : memref<1x256xf32, #tpu.memory_space<vmem>>, vector<1x256xf32>
    %7 = vector.broadcast %6 : vector<1x256xf32> to vector<16x256xf32>
    %8 = arith.addf %5, %7 : vector<16x256xf32>
    %cst_6 = arith.constant 0.707106769 : f32
    %9 = vector.broadcast %cst_6 : f32 to vector<16x256xf32>
    %10 = arith.mulf %8, %9 : vector<16x256xf32>
    %11 = math.erf %10 : vector<16x256xf32>
    %cst_7 = arith.constant 5.000000e-01 : f32
    %12 = vector.broadcast %cst_7 : f32 to vector<16x256xf32>
    %13 = arith.mulf %12, %11 : vector<16x256xf32>
    %cst_8 = arith.constant 5.000000e-01 : f32
    %14 = vector.broadcast %cst_8 : f32 to vector<16x256xf32>
    %15 = arith.addf %14, %13 : vector<16x256xf32>
    %16 = arith.mulf %8, %15 : vector<16x256xf32>
    %c0_9 = arith.constant 0 : index
    %c0_10 = arith.constant 0 : index
    %17 = vector.load %arg8[%c0_9, %c0_10] : memref<16x128xf32, #tpu.memory_space<vmem>>, vector<16x128xf32>
    %c0_11 = arith.constant 0 : index
    %c0_12 = arith.constant 0 : index
    %18 = vector.load %arg5[%c0_11, %c0_12] : memref<256x128xf32, #tpu.memory_space<vmem>>, vector<256x128xf32>
    %cst_13 = arith.constant dense<0.000000e+00> : vector<16x128xf32>
    %19 = tpu.matmul %16, %18, %cst_13 {dimension_numbers = #tpu.dot_dimension_numbers<[1], [0], [0], [1], [0, 0, 1, 1], [], []>} : vector<16x256xf32>, vector<256x128xf32>, vector<16x128xf32> -> vector<16x128xf32>
    %20 = arith.addf %17, %19 : vector<16x128xf32>
    %c0_14 = arith.constant 0 : index
    %c0_15 = arith.constant 0 : index
    %21 = vector.load %arg8[%c0_14, %c0_15] : memref<16x128xf32, #tpu.memory_space<vmem>>, vector<16x128xf32>
    tpu.vector_store %arg8[%c0_14, %c0_15], %20 {strides = array<i32>} : memref<16x128xf32, #tpu.memory_space<vmem>>, vector<16x128xf32>,
    %c0_i32_16 = arith.constant 0 : i32
    %22 = arith.cmpi eq, %arg1, %c0_i32_16 : i32
    %23 = arith.extui %22 : i1 to i32
    %c0_i32_17 = arith.constant 0 : i32
    %24 = arith.cmpi ne, %23, %c0_i32_17 : i32
    scf.if %24 {
      %c0_18 = arith.constant 0 : index
      %c0_19 = arith.constant 0 : index
      %25 = vector.load %arg8[%c0_18, %c0_19] : memref<16x128xf32, #tpu.memory_space<vmem>>, vector<16x128xf32>
      %c0_20 = arith.constant 0 : index
      %c0_21 = arith.constant 0 : index
      %26 = vector.load %arg6[%c0_20, %c0_21] : memref<1x128xf32, #tpu.memory_space<vmem>>, vector<1x128xf32>
      %27 = vector.broadcast %26 : vector<1x128xf32> to vector<16x128xf32>
      %28 = arith.addf %25, %27 : vector<16x128xf32>
      %c0_22 = arith.constant 0 : index
      %c0_23 = arith.constant 0 : index
      %29 = vector.load %arg7[%c0_22, %c0_23] : memref<16x128xf32, #tpu.memory_space<vmem>>, vector<16x128xf32>
      tpu.vector_store %arg7[%c0_22, %c0_23], %28 {strides = array<i32>} : memref<16x128xf32, #tpu.memory_space<vmem>>, vector<16x128xf32>,
    } else {
    }
    return
  }
  func.func @transform_0(%arg0: i32, %arg1: i32) -> (i32, i32) {
    %c0_i32 = arith.constant 0 : i32
    %c0_i32_0 = arith.constant 0 : i32
    return %arg0, %c0_i32 : i32, i32
  }
  func.func @transform_1(%arg0: i32, %arg1: i32) -> (i32, i32) {
    %c0_i32 = arith.constant 0 : i32
    %c0_i32_0 = arith.constant 0 : i32
    return %c0_i32, %arg1 : i32, i32
  }
  func.func @transform_2(%arg0: i32, %arg1: i32) -> (i32, i32) {
    %c0_i32 = arith.constant 0 : i32
    %c0_i32_0 = arith.constant 0 : i32
    return %c0_i32, %arg1 : i32, i32
  }
  func.func @transform_3(%arg0: i32, %arg1: i32) -> (i32, i32) {
    %c0_i32 = arith.constant 0 : i32
    %c0_i32_0 = arith.constant 0 : i32
    return %arg1, %c0_i32 : i32, i32
  }
  func.func @transform_4(%arg0: i32, %arg1: i32) -> (i32, i32) {
    %c0_i32 = arith.constant 0 : i32
    %c0_i32_0 = arith.constant 0 : i32
    %c0_i32_1 = arith.constant 0 : i32
    return %c0_i32, %c0_i32_0 : i32, i32
  }
  func.func @transform_5(%arg0: i32, %arg1: i32) -> (i32, i32) {
    %c0_i32 = arith.constant 0 : i32
    %c0_i32_0 = arith.constant 0 : i32
    return %arg0, %c0_i32 : i32, i32
  }
}

</mosaic_0001>

<llo_original>
// kernel: _feed_forward_pallas.1
$region0: #{_feed_forward_pallas.1}
  #allocation0 [shape = 'u32[]', space=smem, size = 0x4, offset = 0x4, fixed_abs, tag = 'smem constant byte address 0x4 - core index']
  #allocation1 [shape = 'u32[144,128]{1,0:T(1,128)}', space=vmem, size = 0x12000, scoped, tag = 'internal scratch']
  #allocation2 [shape = 'f32[16,128]{1,0:T(8,128)}', space=vmem, size = 0x2000, scoped, tag = 'scratch operand']
  %s0 = inlined_call_operand.hbm [shape: f32[32,128], index: 0, kind: input, shape index: {}]
  %s1 = inlined_call_operand.hbm [shape: f32[128,256], index: 1, kind: input, shape index: {}]
  %s2 = inlined_call_operand.vmem [shape: f32[1,256], index: 2, kind: input, shape index: {}]
  %s3 = inlined_call_operand.hbm [shape: f32[256,128], index: 3, kind: input, shape index: {}]
  %s4 = inlined_call_operand.vmem [shape: f32[1,128], index: 4, kind: input, shape index: {}]
  %s5 = inlined_call_operand.hbm [shape: f32[32,128], index: 5, kind: output, shape index: {}]
  %s6 = sld [smem:[#allocation0]]
  $region73: #{_feed_forward_pallas.1} parent=0
    _
  %s8 = ssub.s32 1, %s6
  %s9 = scalar_select 0, %s8, %s6
  $region1: #{_feed_forward_pallas.1} parent=0
    #allocation3 [shape = 'u8[16384]{0}', space=vmem, size = 0x4000, scoped, tag = 'input window, operand 0']
    #allocation4 [shape = 's32[2]{0}', space=sflag, size = 0x8, scoped, tag = 'scoped memory for _feed_forward_pallas.1']
    #allocation5 [shape = 's32[2]{0}', space=sflag, size = 0x8, scoped, tag = 'scoped memory for _feed_forward_pallas.1']
    #allocation6 [shape = 'u8[131072]{0}', space=vmem, size = 0x20000, scoped, tag = 'input window, operand 1, single buffered']
    #allocation7 [shape = 's32[1]{0}', space=sflag, size = 0x4, scoped, tag = 'scoped memory for _feed_forward_pallas.1']
    #allocation8 [shape = 'u8[131072]{0}', space=vmem, size = 0x20000, scoped, tag = 'input window, operand 3, single buffered']
    #allocation9 [shape = 'u8[16384]{0}', space=vmem, size = 0x4000, scoped, tag = 'output window, operand 0']
    %10 = vsyncpa [#allocation4], 0
    %s11 = scalar_lea.sflag [#allocation4], 1
    %12 = vsyncpa %s11, 0
    %13 = vsyncpa [#allocation7], 0
    %14 = vsyncpa [#allocation5], 0
    %s15 = scalar_lea.sflag [#allocation5], 1
    %16 = vsyncpa %s15, 0
    loop: start=0, step=1, limit=4
    $region2: #{_feed_forward_pallas.1} parent=1 // loop_pre_header
      _
    $region3: #{_feed_forward_pallas.1} parent=1 // loop_header
      %s18 = sphi 0, %s22
      %p19 = scmp.ge.s32.totalorder %s18, 4
      %s25 = sphi 0, %s37
      %s26 = sphi 0, %s33
      %s27 = sphi 0, %s25
      %s28 = sphi 0, %s26
      %s29 = sphi 0, %s27
      %s30 = sphi 0, %s28
      %s40 = sphi 0, %s42
      %s43 = sphi 0, %s40
      %s44 = sphi 0, %s43
      %s60 = sphi 0, %s44
      %s66 = sphi 0, %s68
      %s69 = sphi 0, %s66
      %s70 = sphi 0, %s69
      %s86 = sphi 0, %s70
      %s92 = sphi 0, %s94
      %s95 = sphi 0, %s92
      %s96 = sphi 0, %s95
      %s112 = sphi 0, %s96
      %s118 = sphi 0, %s120
      %s121 = sphi 0, %s118
      %s122 = sphi 0, %s121
      %s138 = sphi 0, %s122
      %s142 = sphi 0, %s142
      %s144 = sphi 0, %s142
      %s145 = sphi 0, %s144
      %s159 = sphi 0, %s145
      %s165 = sphi 0, %s167
      %s168 = sphi 0, %s165
      %s169 = sphi 0, %s168
      %s185 = sphi 0, %s169
    $region4: #{_feed_forward_pallas.1} parent=1 // loop_header_branch
      %21 = sbr.rel (%p19) target = $region8
    $region5: #{_feed_forward_pallas.1} parent=1 // loop_body
      %s23 = ssub.s32 %s18, 1
      %s24 = ssub.s32 %s18, 2
      %s31 = sadd.s32 1, %s26
      %p32 = scmp.ge.s32.totalorder %s31, 1
      %s33 = scalar_select %p32, 0, %s31
      %s34 = sadd.s32 1, %s25
      %s35 = scalar_select %p32, %s34, %s25
      %p36 = scmp.ge.s32.totalorder %s35, 2
      %s37 = scalar_select %p36, 0, %s35
      %s38 = ssub.s32 %s25, %s37
      %p39 = scmp.eq.s32.totalorder %s38, 0
      %s41 = sadd.s32 %s40, 1
      %s42 = scalar_select %p39, %s40, %s41
      %p45 = pneg %p39
      %p46 = scmp.eq.s32.totalorder %s18, 1
      %p47 = por %p45, %p46
      %p48 = scmp.ne.s32.totalorder %s40, %s43
      %p49 = scmp.eq.s32.totalorder %s18, 0
      %p50 = por %p48, %p49
      %p51 = scmp.ne.s32.totalorder %s40, %s43
      %p52 = scmp.eq.s32.totalorder %s23, 1
      %p53 = por %p51, %p52
      %p54 = scmp.ne.s32.totalorder %s43, %s44
      %p55 = scmp.eq.s32.totalorder %s23, 0
      %p56 = por %p54, %p55
      %p57 = scmp.ne.s32.totalorder %s43, %s44
      %p58 = scmp.eq.s32.totalorder %s24, 1
      %p59 = por %p57, %p58
      %p61 = scmp.ne.s32.totalorder %s44, %s60
      %p62 = scmp.eq.s32.totalorder %s24, 0
      %p63 = por %p61, %p62
      %s64 = ssub.s32 %s26, %s33
      %p65 = scmp.eq.s32.totalorder %s64, 0
      %s67 = sadd.s32 %s66, 1
      %s68 = scalar_select %p65, %s66, %s67
      %p71 = pneg %p65
      %p72 = scmp.eq.s32.totalorder %s18, 1
      %p73 = por %p71, %p72
      %p74 = scmp.ne.s32.totalorder %s66, %s69
      %p75 = scmp.eq.s32.totalorder %s18, 0
      %p76 = por %p74, %p75
      %p77 = scmp.ne.s32.totalorder %s66, %s69
      %p78 = scmp.eq.s32.totalorder %s23, 1
      %p79 = por %p77, %p78
      %p80 = scmp.ne.s32.totalorder %s69, %s70
      %p81 = scmp.eq.s32.totalorder %s23, 0
      %p82 = por %p80, %p81
      %p83 = scmp.ne.s32.totalorder %s69, %s70
      %p84 = scmp.eq.s32.totalorder %s24, 1
      %p85 = por %p83, %p84
      %p87 = scmp.ne.s32.totalorder %s70, %s86
      %p88 = scmp.eq.s32.totalorder %s24, 0
      %p89 = por %p87, %p88
      %s90 = ssub.s32 %s26, %s33
      %p91 = scmp.eq.s32.totalorder %s90, 0
      %s93 = sadd.s32 %s92, 1
      %s94 = scalar_select %p91, %s92, %s93
      %p97 = pneg %p91
      %p98 = scmp.eq.s32.totalorder %s18, 1
      %p99 = por %p97, %p98
      %p100 = scmp.ne.s32.totalorder %s92, %s95
      %p101 = scmp.eq.s32.totalorder %s18, 0
      %p102 = por %p100, %p101
      %p103 = scmp.ne.s32.totalorder %s92, %s95
      %p104 = scmp.eq.s32.totalorder %s23, 1
      %p105 = por %p103, %p104
      %p106 = scmp.ne.s32.totalorder %s95, %s96
      %p107 = scmp.eq.s32.totalorder %s23, 0
      %p108 = por %p106, %p107
      %p109 = scmp.ne.s32.totalorder %s95, %s96
      %p110 = scmp.eq.s32.totalorder %s24, 1
      %p111 = por %p109, %p110
      %p113 = scmp.ne.s32.totalorder %s96, %s112
      %p114 = scmp.eq.s32.totalorder %s24, 0
      %p115 = por %p113, %p114
      %s116 = ssub.s32 %s26, %s33
      %p117 = scmp.eq.s32.totalorder %s116, 0
      %s119 = sadd.s32 %s118, 1
      %s120 = scalar_select %p117, %s118, %s119
      %p123 = pneg %p117
      %p124 = scmp.eq.s32.totalorder %s18, 1
      %p125 = por %p123, %p124
      %p126 = scmp.ne.s32.totalorder %s118, %s121
      %p127 = scmp.eq.s32.totalorder %s18, 0
      %p128 = por %p126, %p127
      %p129 = scmp.ne.s32.totalorder %s118, %s121
      %p130 = scmp.eq.s32.totalorder %s23, 1
      %p131 = por %p129, %p130
      %p132 = scmp.ne.s32.totalorder %s121, %s122
      %p133 = scmp.eq.s32.totalorder %s23, 0
      %p134 = por %p132, %p133
      %p135 = scmp.ne.s32.totalorder %s121, %s122
      %p136 = scmp.eq.s32.totalorder %s24, 1
      %p137 = por %p135, %p136
      %p139 = scmp.ne.s32.totalorder %s122, %s138
      %p140 = scmp.eq.s32.totalorder %s24, 0
      %p141 = por %p139, %p140
      %s143 = sadd.s32 %s142, 1
      %p146 = scmp.eq.s32.totalorder %s18, 1
      %p147 = scmp.ne.s32.totalorder %s142, %s144
      %p148 = scmp.eq.s32.totalorder %s18, 0
      %p149 = por %p147, %p148
      %p150 = scmp.ne.s32.totalorder %s142, %s144
      %p151 = scmp.eq.s32.totalorder %s23, 1
      %p152 = por %p150, %p151
      %p153 = scmp.ne.s32.totalorder %s144, %s145
      %p154 = scmp.eq.s32.totalorder %s23, 0
      %p155 = por %p153, %p154
      %p156 = scmp.ne.s32.totalorder %s144, %s145
      %p157 = scmp.eq.s32.totalorder %s24, 1
      %p158 = por %p156, %p157
      %p160 = scmp.ne.s32.totalorder %s145, %s159
      %p161 = scmp.eq.s32.totalorder %s24, 0
      %p162 = por %p160, %p161
      %s163 = ssub.s32 %s25, %s37
      %p164 = scmp.eq.s32.totalorder %s163, 0
      %s166 = sadd.s32 %s165, 1
      %s167 = scalar_select %p164, %s165, %s166
      %p170 = pneg %p164
      %p171 = scmp.eq.s32.totalorder %s18, 1
      %p172 = por %p170, %p171
      %p173 = scmp.ne.s32.totalorder %s165, %s168
      %p174 = scmp.eq.s32.totalorder %s18, 0
      %p175 = por %p173, %p174
      %p176 = scmp.ne.s32.totalorder %s165, %s168
      %p177 = scmp.eq.s32.totalorder %s23, 1
      %p178 = por %p176, %p177
      %p179 = scmp.ne.s32.totalorder %s168, %s169
      %p180 = scmp.eq.s32.totalorder %s23, 0
      %p181 = por %p179, %p180
      %p182 = scmp.ne.s32.totalorder %s168, %s169
      %p183 = scmp.eq.s32.totalorder %s24, 1
      %p184 = por %p182, %p183
      %p186 = scmp.ne.s32.totalorder %s169, %s185
      %p187 = scmp.eq.s32.totalorder %s24, 0
      %p188 = por %p186, %p187
      %p189 = scmp.le.s32.totalorder 1, %s18
      %p190 = scmp.lt.s32.totalorder %s18, 3
      %p191 = pnand %p189, %p190
      %p192 = pneg %p191
      // Predicated region
      $region9: #{_feed_forward_pallas.1} parent=5 // pred_check
        _
      $region10: #{_feed_forward_pallas.1} parent=5 // pred_check_branch
        %194 = sbr.rel (%p191) target = $region12
      $region11: #{_feed_forward_pallas.1} parent=5 // pred_region
        %s195 = ssub.s32 %s18, 1
        // Predicated region
        $region13: #{_feed_forward_pallas.1} parent=11 // pred_check
          %p196 = pneg %p82
        $region14: #{_feed_forward_pallas.1} parent=11 // pred_check_branch
          %198 = sbr.rel (%p196) target = $region16
        $region15: #{_feed_forward_pallas.1} parent=11 // pred_region
          %s199 = smul.u32 2, %s28
          %s201 = ssub.s32 4096, 4096
          %202 = vsyncadd [#allocation7], %s201
          %s203 = smul.addr %s199, 128
          %s204 = scalar_lea.hbm %s1, %s203
          %s205 = sshll.u32 [#allocation6], 4
          %s206 = int_to_ptr.vmem [resolvable:$true] %s205
          %211 = dma.hbm_to_vmem [thread:$0]  %s204, 4096, %s206, [#allocation7], 256, 256, 16
        $region16: #{_feed_forward_pallas.1} parent=11 // pred_fallthru
          _
        // Predicated region
        $region17: #{_feed_forward_pallas.1} parent=11 // pred_check
          %p212 = pneg %p108
        $region18: #{_feed_forward_pallas.1} parent=11 // pred_check_branch
          %214 = sbr.rel (%p212) target = $region20
        $region19: #{_feed_forward_pallas.1} parent=11 // pred_region
          %s215 = smul.u32 2, %s28
          %p216 = scmp.lt.s32.totalorder %s215, 1
          %s217 = scalar_select %p216, %s215, 1
          %s218 = scalar_lea.vmem %s2, %s217
          %s219 = smul.u32 2, %s28
        $region20: #{_feed_forward_pallas.1} parent=11 // pred_fallthru
          _
        // Predicated region
        $region21: #{_feed_forward_pallas.1} parent=11 // pred_check
          %p220 = pneg %p134
        $region22: #{_feed_forward_pallas.1} parent=11 // pred_check_branch
          %222 = sbr.rel (%p220) target = $region24
        $region23: #{_feed_forward_pallas.1} parent=11 // pred_region
          %s223 = smul.u32 32, %s28
          %s225 = ssub.s32 4096, 4096
          %226 = vsyncadd [#allocation7], %s225
          %s227 = smul.addr %s223, 128
          %s228 = scalar_lea.hbm %s3, %s227
          %s229 = sshll.u32 [#allocation8], 4
          %s230 = int_to_ptr.vmem [resolvable:$true] %s229
          %235 = dma.hbm_to_vmem [thread:$0]  %s228, 4096, %s230, [#allocation7], 128, 128, 8
        $region24: #{_feed_forward_pallas.1} parent=11 // pred_fallthru
          _
        // Predicated region
        $region25: #{_feed_forward_pallas.1} parent=11 // pred_check
          %p236 = pneg %p155
        $region26: #{_feed_forward_pallas.1} parent=11 // pred_check_branch
          %238 = sbr.rel (%p236) target = $region28
        $region27: #{_feed_forward_pallas.1} parent=11 // pred_region
          _
        $region28: #{_feed_forward_pallas.1} parent=11 // pred_fallthru
          _
      $region12: #{_feed_forward_pallas.1} parent=5 // pred_fallthru
        _
      %p239 = scmp.lt.s32.totalorder %s18, 2
      // Predicated region
      $region29: #{_feed_forward_pallas.1} parent=5 // pred_check
        %p240 = pneg %p239
      $region30: #{_feed_forward_pallas.1} parent=5 // pred_check_branch
        %242 = sbr.rel (%p240) target = $region32
      $region31: #{_feed_forward_pallas.1} parent=5 // pred_region
        // Predicated region
        $region33: #{_feed_forward_pallas.1} parent=31 // pred_check
          %p243 = pneg %p50
        $region34: #{_feed_forward_pallas.1} parent=31 // pred_check_branch
          %245 = sbr.rel (%p243) target = $region36
        $region35: #{_feed_forward_pallas.1} parent=31 // pred_region
          %s246 = sand.u32 %s40, 1
          %s247 = scalar_lea.sflag [#allocation4], %s246
          %s248 = sand.u32 %s40, 1
          %s249 = smul.addr %s248, 16
          %s250 = scalar_lea.vmem [#allocation3], %s249
          %s251 = smul.u32 2, %s25
          %s253 = ssub.s32 256, 256
          %254 = vsyncadd %s247, %s253
          %s255 = smul.addr %s251, 128
          %s256 = scalar_lea.hbm %s0, %s255
          %s257 = sshll.u32 %s250, 4
          %s258 = int_to_ptr.vmem [resolvable:$true] %s257
          %263 = dma.hbm_to_vmem [thread:$0]  %s256, 256, %s258, %s247, 128, 128, 8
        $region36: #{_feed_forward_pallas.1} parent=31 // pred_fallthru
          _
      $region32: #{_feed_forward_pallas.1} parent=5 // pred_fallthru
        _
      %p264 = scmp.le.s32.totalorder 1, %s18
      %p265 = scmp.lt.s32.totalorder %s18, 3
      %p266 = pnand %p264, %p265
      %p267 = pneg %p266
      // Predicated region
      $region37: #{_feed_forward_pallas.1} parent=5 // pred_check
        _
      $region38: #{_feed_forward_pallas.1} parent=5 // pred_check_branch
        %269 = sbr.rel (%p266) target = $region40
      $region39: #{_feed_forward_pallas.1} parent=5 // pred_region
        %s270 = ssub.s32 %s18, 1
        %s271 = sand.u32 %s43, 1
        %s272 = scalar_lea.sflag [#allocation4], %s271
        %s273 = sand.u32 %s43, 1
        %s274 = smul.addr %s273, 16
        %s275 = scalar_lea.vmem [#allocation3], %s274
        // Predicated region
        $region41: #{_feed_forward_pallas.1} parent=39 // pred_check
          %p276 = pneg %p56
        $region42: #{_feed_forward_pallas.1} parent=39 // pred_check_branch
          %278 = sbr.rel (%p276) target = $region44
        $region43: #{_feed_forward_pallas.1} parent=39 // pred_region
          %279 = dma.done %s272, 256
        $region44: #{_feed_forward_pallas.1} parent=39 // pred_fallthru
          _
        // Predicated region
        $region45: #{_feed_forward_pallas.1} parent=39 // pred_check
          %p280 = pneg %p82
        $region46: #{_feed_forward_pallas.1} parent=39 // pred_check_branch
          %282 = sbr.rel (%p280) target = $region48
        $region47: #{_feed_forward_pallas.1} parent=39 // pred_region
          %283 = dma.done [#allocation7], 4096
        $region48: #{_feed_forward_pallas.1} parent=39 // pred_fallthru
          _
        // Predicated region
        $region49: #{_feed_forward_pallas.1} parent=39 // pred_check
          %p284 = pneg %p134
        $region50: #{_feed_forward_pallas.1} parent=39 // pred_check_branch
          %286 = sbr.rel (%p284) target = $region52
        $region51: #{_feed_forward_pallas.1} parent=39 // pred_region
          %287 = dma.done [#allocation7], 4096
        $region52: #{_feed_forward_pallas.1} parent=39 // pred_fallthru
          _
        %s288 = sand.u32 %s43, 1
        %s289 = scalar_lea.sflag [#allocation4], %s288
        %s290 = sand.u32 %s43, 1
        %s291 = smul.addr %s290, 16
        %s292 = scalar_lea.vmem [#allocation3], %s291
        %p293 = pneg %p56
        %p294 = pneg %p53
        %p295 = pneg %p82
        %p296 = pneg %p79
        %s297 = smul.u32 2, %s28
        %p298 = scmp.lt.s32.totalorder %s297, 1
        %s299 = scalar_select %p298, %s297, 1
        %s300 = scalar_lea.vmem %s2, %s299
        %p301 = pneg %p108
        %p302 = pneg %p105
        %p303 = pneg %p134
        %p304 = pneg %p131
        %p305 = pneg %p155
        %p306 = pneg %p152
        %p307 = pneg %p181
        %p308 = pneg %p178
        %s309 = sand.u32 %s168, 1
        %s310 = scalar_lea.sflag [#allocation5], %s309
        %s311 = sand.u32 %s168, 1
        %s312 = smul.addr %s311, 16
        %s313 = scalar_lea.vmem [#allocation9], %s312
        %s314 = smul.u32 2, %s27
        %s315 = smul.u32 2, %s28
        %s316 = smul.u32 2, %s28
        %p317 = scmp.lt.s32.totalorder %s316, 1
        %s318 = scalar_select %p317, %s316, 1
        %s319 = scalar_lea.vmem %s2, %s318
        %s320 = smul.u32 2, %s28
        %s321 = smul.u32 32, %s28
        %s322 = smul.u32 2, %s27
        %p323 = scmp.eq.s32.totalorder %s28, 0
        // Predicated region
        $region53: #{_feed_forward_pallas.1} parent=39 // pred_check
          %p324 = pneg %p323
        $region54: #{_feed_forward_pallas.1} parent=39 // pred_check_branch
          %326 = sbr.rel (%p324) target = $region56
        $region55: #{_feed_forward_pallas.1} parent=39 // pred_region
          %327 = vst [vmem:[#allocation2] sm:$0xff] 0.0
          %328 = vst [vmem:[#allocation2 + $0x8] sm:$0xff] 0.0
        $region56: #{_feed_forward_pallas.1} parent=39 // pred_fallthru
          _
        %v329 = vld [vmem:[%s275] sm:$0xff]
        %v330 = vld [vmem:[%s275 + $0x8] sm:$0xff]
        %v331 = vld [vmem:[#allocation6] sm:$0xff]
        %v332 = vld [vmem:[#allocation6 + $0x8] sm:$0xff]
        %v333 = vld [vmem:[#allocation6 + $0x10] sm:$0xff]
        %v334 = vld [vmem:[#allocation6 + $0x18] sm:$0xff]
        %v335 = vld [vmem:[#allocation6 + $0x20] sm:$0xff]
        %v336 = vld [vmem:[#allocation6 + $0x28] sm:$0xff]
        %v337 = vld [vmem:[#allocation6 + $0x30] sm:$0xff]
        %v338 = vld [vmem:[#allocation6 + $0x38] sm:$0xff]
        %v339 = vld [vmem:[#allocation6 + $0x40] sm:$0xff]
        %v340 = vld [vmem:[#allocation6 + $0x48] sm:$0xff]
        %v341 = vld [vmem:[#allocation6 + $0x50] sm:$0xff]
        %v342 = vld [vmem:[#allocation6 + $0x58] sm:$0xff]
        %v343 = vld [vmem:[#allocation6 + $0x60] sm:$0xff]
        %v344 = vld [vmem:[#allocation6 + $0x68] sm:$0xff]
        %v345 = vld [vmem:[#allocation6 + $0x70] sm:$0xff]
        %v346 = vld [vmem:[#allocation6 + $0x78] sm:$0xff]
        %v347 = vld [vmem:[#allocation6 + $0x80] sm:$0xff]
        %v348 = vld [vmem:[#allocation6 + $0x88] sm:$0xff]
        %v349 = vld [vmem:[#allocation6 + $0x90] sm:$0xff]
        %v350 = vld [vmem:[#allocation6 + $0x98] sm:$0xff]
        %v351 = vld [vmem:[#allocation6 + $0xa0] sm:$0xff]
        %v352 = vld [vmem:[#allocation6 + $0xa8] sm:$0xff]
        %v353 = vld [vmem:[#allocation6 + $0xb0] sm:$0xff]
        %v354 = vld [vmem:[#allocation6 + $0xb8] sm:$0xff]
        %v355 = vld [vmem:[#allocation6 + $0xc0] sm:$0xff]
        %v356 = vld [vmem:[#allocation6 + $0xc8] sm:$0xff]
        %v357 = vld [vmem:[#allocation6 + $0xd0] sm:$0xff]
        %v358 = vld [vmem:[#allocation6 + $0xd8] sm:$0xff]
        %v359 = vld [vmem:[#allocation6 + $0xe0] sm:$0xff]
        %v360 = vld [vmem:[#allocation6 + $0xe8] sm:$0xff]
        %v361 = vld [vmem:[#allocation6 + $0xf0] sm:$0xff]
        %v362 = vld [vmem:[#allocation6 + $0xf8] sm:$0xff]
        %v363 = vld [vmem:[%s319] sm:$0x3]
        %v365 = vlaneseq
        %v366 = vshrl.u32 %v365, 7
        %v367 = vsub.s32 0, %v366
        %v368 = vrot.slane %v363, %v367
        %v369 = vlaneseq
        %v370 = vshrl.u32 %v369, 7
        %v371 = vsub.s32 1, %v370
        %v372 = vrot.slane %v363, %v371
        %375 = vmatprep.subr.mxu0 %v362
        %376 = vmatpush1.msra.mxu0 %v361
        %377 = vmatprep.subr.mxu0 %v360
        %378 = vmatpush1.msra.mxu0 %v359
        %379 = vmatprep.subr.mxu0 %v358
        %380 = vmatpush1.msra.mxu0 %v357
        %381 = vmatprep.subr.mxu0 %v356
        %382 = vmatpush1.msra.mxu0 %v355
        %383 = vmatprep.subr.mxu0 %v354
        %384 = vmatpush1.msra.mxu0 %v353
        %385 = vmatprep.subr.mxu0 %v352
        %386 = vmatpush1.msra.mxu0 %v351
        %387 = vmatprep.subr.mxu0 %v350
        %388 = vmatpush1.msra.mxu0 %v349
        %389 = vmatprep.subr.mxu0 %v348
        %390 = vmatpush1.msra.mxu0 %v347
        %391 = vmatprep.subr.mxu0 %v346
        %392 = vmatpush1.msra.mxu0 %v345
        %393 = vmatprep.subr.mxu0 %v344
        %394 = vmatpush1.msra.mxu0 %v343
        %395 = vmatprep.subr.mxu0 %v342
        %396 = vmatpush1.msra.mxu0 %v341
        %397 = vmatprep.subr.mxu0 %v340
        %398 = vmatpush1.msra.mxu0 %v339
        %399 = vmatprep.subr.mxu0 %v338
        %400 = vmatpush1.msra.mxu0 %v337
        %401 = vmatprep.subr.mxu0 %v336
        %402 = vmatpush1.msra.mxu0 %v335
        %403 = vmatprep.subr.mxu0 %v334
        %404 = vmatpush1.msra.mxu0 %v333
        %405 = vmatprep.subr.mxu0 %v332
        %406 = vmatpush1.msra.mxu0 %v331
        %407 = vmatprep.subr.mxu0 0.0
        %408 = vmatpush2.msra.mxu0 0.0
        %409 = vmatprep.subr.mxu0 0.0
        %410 = vmatpush2.msra.mxu0 0.0
        %411 = vmatprep.subr.mxu0 0.0
        %412 = vmatpush2.msra.mxu0 0.0
        %413 = vmatprep.subr.mxu0 0.0
        %414 = vmatpush2.msra.mxu0 0.0
        %415 = vmatprep.subr.mxu0 0.0
        %416 = vmatpush2.msra.mxu0 0.0
        %417 = vmatprep.subr.mxu0 0.0
        %418 = vmatpush2.msra.mxu0 0.0
        %419 = vmatprep.subr.mxu0 0.0
        %420 = vmatpush2.msra.mxu0 0.0
        %421 = vmatprep.subr.mxu0 0.0
        %422 = vmatpush2.msra.mxu0 0.0
        %423 = vmatprep.subr.mxu0 0.0
        %424 = vmatpush2.msra.mxu0 0.0
        %425 = vmatprep.subr.mxu0 0.0
        %426 = vmatpush2.msra.mxu0 0.0
        %427 = vmatprep.subr.mxu0 0.0
        %428 = vmatpush2.msra.mxu0 0.0
        %429 = vmatprep.subr.mxu0 0.0
        %430 = vmatpush2.msra.mxu0 0.0
        %431 = vmatprep.subr.mxu0 0.0
        %432 = vmatpush2.msra.mxu0 0.0
        %433 = vmatprep.subr.mxu0 0.0
        %434 = vmatpush2.msra.mxu0 0.0
        %435 = vmatprep.subr.mxu0 0.0
        %436 = vmatpush2.msra.mxu0 0.0
        %437 = vmatprep.subr.mxu0 0.0
        %438 = vmatpush2.msra.mxu0 0.0
        %439 = vmatprep.mubr.f32.mxu0 0.0
        %440 = vmatmul.mubr.f32.gmra.mxu0 %v329
        %v441 = vpop.f32.mrf.mxu0
        %v442 = vadd.f32 %v368, %v441
        %v443 = vpop.f32.mrf.mxu0
        %v444 = vadd.f32 %v372, %v443
        %445 = vmatprep.mubr.f32.mxu0 0.0
        %446 = vmatmul.mubr.f32.gmra.mxu0 %v330
        %v447 = vpop.f32.mrf.mxu0
        %v448 = vadd.f32 %v368, %v447
        %v449 = vpop.f32.mrf.mxu0
        %v450 = vadd.f32 %v372, %v449
        %451 = vdwg.mxu0
        %v452 = vmul.f32 %v442, 0.70710677
        %v453 = vmul.f32 %v444, 0.70710677
        %v454 = vmul.f32 %v448, 0.70710677
        %v455 = vmul.f32 %v450, 0.70710677
        %v456 = verf.f32.pop %v452
        %v457 = verf.f32.pop %v453
        %v458 = verf.f32.pop %v454
        %v459 = verf.f32.pop %v455
        %v460 = vmul.f32 %v456, 0.5
        %v461 = vmul.f32 %v457, 0.5
        %v462 = vmul.f32 %v458, 0.5
        %v463 = vmul.f32 %v459, 0.5
        %v464 = vadd.f32 %v460, 0.5
        %v465 = vadd.f32 %v461, 0.5
        %v466 = vadd.f32 %v462, 0.5
        %v467 = vadd.f32 %v463, 0.5
        %v468 = vmul.f32 %v442, %v464
        %v469 = vmul.f32 %v444, %v465
        %v470 = vmul.f32 %v448, %v466
        %v471 = vmul.f32 %v450, %v467
        %v472 = vld [vmem:[#allocation2] sm:$0xff]
        %v473 = vld [vmem:[#allocation2 + $0x8] sm:$0xff]
        %v474 = vld [vmem:[#allocation8] sm:$0xff]
        %v475 = vld [vmem:[#allocation8 + $0x8] sm:$0xff]
        %v476 = vld [vmem:[#allocation8 + $0x10] sm:$0xff]
        %v477 = vld [vmem:[#allocation8 + $0x18] sm:$0xff]
        %v478 = vld [vmem:[#allocation8 + $0x20] sm:$0xff]
        %v479 = vld [vmem:[#allocation8 + $0x28] sm:$0xff]
        %v480 = vld [vmem:[#allocation8 + $0x30] sm:$0xff]
        %v481 = vld [vmem:[#allocation8 + $0x38] sm:$0xff]
        %v482 = vld [vmem:[#allocation8 + $0x40] sm:$0xff]
        %v483 = vld [vmem:[#allocation8 + $0x48] sm:$0xff]
        %v484 = vld [vmem:[#allocation8 + $0x50] sm:$0xff]
        %v485 = vld [vmem:[#allocation8 + $0x58] sm:$0xff]
        %v486 = vld [vmem:[#allocation8 + $0x60] sm:$0xff]
        %v487 = vld [vmem:[#allocation8 + $0x68] sm:$0xff]
        %v488 = vld [vmem:[#allocation8 + $0x70] sm:$0xff]
        %v489 = vld [vmem:[#allocation8 + $0x78] sm:$0xff]
        %v490 = vld [vmem:[#allocation8 + $0x80] sm:$0xff]
        %v491 = vld [vmem:[#allocation8 + $0x88] sm:$0xff]
        %v492 = vld [vmem:[#allocation8 + $0x90] sm:$0xff]
        %v493 = vld [vmem:[#allocation8 + $0x98] sm:$0xff]
        %v494 = vld [vmem:[#allocation8 + $0xa0] sm:$0xff]
        %v495 = vld [vmem:[#allocation8 + $0xa8] sm:$0xff]
        %v496 = vld [vmem:[#allocation8 + $0xb0] sm:$0xff]
        %v497 = vld [vmem:[#allocation8 + $0xb8] sm:$0xff]
        %v498 = vld [vmem:[#allocation8 + $0xc0] sm:$0xff]
        %v499 = vld [vmem:[#allocation8 + $0xc8] sm:$0xff]
        %v500 = vld [vmem:[#allocation8 + $0xd0] sm:$0xff]
        %v501 = vld [vmem:[#allocation8 + $0xd8] sm:$0xff]
        %v502 = vld [vmem:[#allocation8 + $0xe0] sm:$0xff]
        %v503 = vld [vmem:[#allocation8 + $0xe8] sm:$0xff]
        %v504 = vld [vmem:[#allocation8 + $0xf0] sm:$0xff]
        %v505 = vld [vmem:[#allocation8 + $0xf8] sm:$0xff]
        %506 = vmatprep.subr.mxu0 0.0
        %507 = vmatpush1.msra.mxu0 %v489
        %508 = vmatprep.subr.mxu0 0.0
        %509 = vmatpush1.msra.mxu0 %v488
        %510 = vmatprep.subr.mxu0 0.0
        %511 = vmatpush1.msra.mxu0 %v487
        %512 = vmatprep.subr.mxu0 0.0
        %513 = vmatpush1.msra.mxu0 %v486
        %514 = vmatprep.subr.mxu0 0.0
        %515 = vmatpush1.msra.mxu0 %v485
        %516 = vmatprep.subr.mxu0 0.0
        %517 = vmatpush1.msra.mxu0 %v484
        %518 = vmatprep.subr.mxu0 0.0
        %519 = vmatpush1.msra.mxu0 %v483
        %520 = vmatprep.subr.mxu0 0.0
        %521 = vmatpush1.msra.mxu0 %v482
        %522 = vmatprep.subr.mxu0 0.0
        %523 = vmatpush1.msra.mxu0 %v481
        %524 = vmatprep.subr.mxu0 0.0
        %525 = vmatpush1.msra.mxu0 %v480
        %526 = vmatprep.subr.mxu0 0.0
        %527 = vmatpush1.msra.mxu0 %v479
        %528 = vmatprep.subr.mxu0 0.0
        %529 = vmatpush1.msra.mxu0 %v478
        %530 = vmatprep.subr.mxu0 0.0
        %531 = vmatpush1.msra.mxu0 %v477
        %532 = vmatprep.subr.mxu0 0.0
        %533 = vmatpush1.msra.mxu0 %v476
        %534 = vmatprep.subr.mxu0 0.0
        %535 = vmatpush1.msra.mxu0 %v475
        %536 = vmatprep.subr.mxu0 0.0
        %537 = vmatpush1.msra.mxu0 %v474
        %538 = vmatprep.subr.mxu0 0.0
        %539 = vmatpush2.msra.mxu0 %v505
        %540 = vmatprep.subr.mxu0 0.0
        %541 = vmatpush2.msra.mxu0 %v504
        %542 = vmatprep.subr.mxu0 0.0
        %543 = vmatpush2.msra.mxu0 %v503
        %544 = vmatprep.subr.mxu0 0.0
        %545 = vmatpush2.msra.mxu0 %v502
        %546 = vmatprep.subr.mxu0 0.0
        %547 = vmatpush2.msra.mxu0 %v501
        %548 = vmatprep.subr.mxu0 0.0
        %549 = vmatpush2.msra.mxu0 %v500
        %550 = vmatprep.subr.mxu0 0.0
        %551 = vmatpush2.msra.mxu0 %v499
        %552 = vmatprep.subr.mxu0 0.0
        %553 = vmatpush2.msra.mxu0 %v498
        %554 = vmatprep.subr.mxu0 0.0
        %555 = vmatpush2.msra.mxu0 %v497
        %556 = vmatprep.subr.mxu0 0.0
        %557 = vmatpush2.msra.mxu0 %v496
        %558 = vmatprep.subr.mxu0 0.0
        %559 = vmatpush2.msra.mxu0 %v495
        %560 = vmatprep.subr.mxu0 0.0
        %561 = vmatpush2.msra.mxu0 %v494
        %562 = vmatprep.subr.mxu0 0.0
        %563 = vmatpush2.msra.mxu0 %v493
        %564 = vmatprep.subr.mxu0 0.0
        %565 = vmatpush2.msra.mxu0 %v492
        %566 = vmatprep.subr.mxu0 0.0
        %567 = vmatpush2.msra.mxu0 %v491
        %568 = vmatprep.subr.mxu0 0.0
        %569 = vmatpush2.msra.mxu0 %v490
        %570 = vmatprep.mubr.f32.mxu0 %v469
        %571 = vmatmul.mubr.f32.gmra.mxu0 %v468
        %v572 = vpop.f32.mrf.mxu0
        %v573 = vadd.f32 0.0, %v572
        %v574 = vpop.f32.mrf.mxu0
        %575 = vmatprep.mubr.f32.mxu0 %v471
        %576 = vmatmul.mubr.f32.gmra.mxu0 %v470
        %v577 = vpop.f32.mrf.mxu0
        %v578 = vadd.f32 0.0, %v577
        %v579 = vpop.f32.mrf.mxu0
        %580 = vdwg.mxu0
        %v581 = vadd.f32 %v472, %v573
        %v582 = vadd.f32 %v473, %v578
        %583 = vst [vmem:[#allocation2] sm:$0xff] %v581
        %584 = vst [vmem:[#allocation2 + $0x8] sm:$0xff] %v582
        // Predicated region
        $region57: #{_feed_forward_pallas.1} parent=39 // pred_check
          %p585 = pneg %p323
        $region58: #{_feed_forward_pallas.1} parent=39 // pred_check_branch
          %587 = sbr.rel (%p585) target = $region60
        $region59: #{_feed_forward_pallas.1} parent=39 // pred_region
          %v588 = vld [vmem:[#allocation2] sm:$0xff]
          %v589 = vld [vmem:[#allocation2 + $0x8] sm:$0xff]
          %v590 = vld [vmem:[%s4] sm:$0x1]
          %v592 = vlaneseq
          %v593 = vshrl.u32 %v592, 7
          %v594 = vsub.s32 0, %v593
          %v595 = vrot.slane %v590, %v594
          %v597 = vadd.f32 %v588, %v595
          %v598 = vadd.f32 %v589, %v595
          %599 = vst [vmem:[%s313] sm:$0xff] %v597
          %600 = vst [vmem:[%s313 + $0x8] sm:$0xff] %v598
        $region60: #{_feed_forward_pallas.1} parent=39 // pred_fallthru
          _
        %s601 = sand.u32 %s168, 1
        %s602 = scalar_lea.sflag [#allocation5], %s601
        %s603 = sand.u32 %s168, 1
        %s604 = smul.addr %s603, 16
        %s605 = scalar_lea.vmem [#allocation9], %s604
        // Predicated region
        $region61: #{_feed_forward_pallas.1} parent=39 // pred_check
          %p606 = pneg %p178
        $region62: #{_feed_forward_pallas.1} parent=39 // pred_check_branch
          %608 = sbr.rel (%p606) target = $region64
        $region63: #{_feed_forward_pallas.1} parent=39 // pred_region
          %s609 = smul.u32 2, %s27
          %s611 = ssub.s32 256, 256
          %612 = vsyncadd %s602, %s611
          %s613 = smul.addr %s609, 128
          %s614 = scalar_lea.hbm %s5, %s613
          %s615 = sshll.u32 %s605, 4
          %s616 = int_to_ptr.vmem [resolvable:$true] %s615
          %621 = dma.vmem_to_hbm [thread:$0]  %s616, 256, %s614, %s602, 128, 128, 8
        $region64: #{_feed_forward_pallas.1} parent=39 // pred_fallthru
          _
      $region40: #{_feed_forward_pallas.1} parent=5 // pred_fallthru
        _
      %p622 = scmp.le.s32.totalorder 2, %s18
      // Predicated region
      $region65: #{_feed_forward_pallas.1} parent=5 // pred_check
        %p623 = pneg %p622
      $region66: #{_feed_forward_pallas.1} parent=5 // pred_check_branch
        %625 = sbr.rel (%p623) target = $region68
      $region67: #{_feed_forward_pallas.1} parent=5 // pred_region
        %s626 = ssub.s32 %s18, 2
        // Predicated region
        $region69: #{_feed_forward_pallas.1} parent=67 // pred_check
          %p627 = pneg %p184
        $region70: #{_feed_forward_pallas.1} parent=67 // pred_check_branch
          %629 = sbr.rel (%p627) target = $region72
        $region71: #{_feed_forward_pallas.1} parent=67 // pred_region
          %s630 = sand.u32 %s169, 1
          %s631 = scalar_lea.sflag [#allocation5], %s630
          %s632 = sand.u32 %s169, 1
          %s633 = smul.addr %s632, 16
          %s634 = scalar_lea.vmem [#allocation9], %s633
          %635 = dma.done %s631, 256
        $region72: #{_feed_forward_pallas.1} parent=67 // pred_fallthru
          _
      $region68: #{_feed_forward_pallas.1} parent=5 // pred_fallthru
        _
    $region6: #{_feed_forward_pallas.1} parent=1 // loop_footer
      %s22 = sadd.s32 1, %s18
    $region7: #{_feed_forward_pallas.1} parent=1 // loop_footer_branch
      %17 = sbr.rel target = $region3
    $region8: #{_feed_forward_pallas.1} parent=1 // loop_exit
      _
    %636 = vsyncpa [#allocation4], 1
    %s637 = scalar_lea.sflag [#allocation4], 1
    %638 = vsyncpa %s637, 1
    %639 = vsyncpa [#allocation7], 1
    %640 = vsyncpa [#allocation5], 1
    %s641 = scalar_lea.sflag [#allocation5], 1
    %642 = vsyncpa %s641, 1

</llo_original>
